<compile_context>
chip_gen: v7x
topology: tpu7x:2x2x1
jax: 0.10.0
libtpu: 0.0.40
codegen_flags: <defaults>
</compile_context>

<pallas_src>
import jax
import jax.numpy as jnp
from jax.experimental import pallas as pl
from jax.experimental.pallas import tpu as pltpu

_LANES = 128
_BUDGET_BYTES = 2 * 1024 * 1024  # per channel-half block


def _round_up(x, m):
    return ((x + m - 1) // m) * m


def _gated_kernel(x_ref, o_ref):
    # x_ref: (2, rows, lanes) -- leading axis is the channel-half.
    a = x_ref[0].astype(jnp.float32)          # tanh branch
    b = x_ref[1].astype(jnp.float32)          # sigmoid branch
    gate = 0.5 * (jnp.tanh(0.5 * b) + 1.0)    # sigmoid via tanh: 1 EUP op
    o_ref[...] = (jnp.tanh(a) * gate).astype(o_ref.dtype)


def _choose_tile_rows(r, itemsize, n):
    """Row-tile (sublane dim) for the (R, 128) slab layout."""
    max_rows = max(8, (_BUDGET_BYTES // (_LANES * itemsize)) // 8 * 8)
    # Keep >= ~4 total grid steps when the tensor is big enough (v7x megacore).
    min_steps = max(1, -(-4 // max(1, n)))
    if r > 8 * min_steps:
        max_rows = min(max_rows, max(8, _round_up(-(-r // min_steps), 8)))
    if r <= max_rows:
        return r          # single full-extent block along rows
    return max_rows       # multiple of 8; ragged last block is masked


def _choose_tile_hw(hw, c, itemsize, n):
    """Lane-tile for the fallback (C, HW) layout."""
    lanes = max(_LANES, (_BUDGET_BYTES // max(1, c * itemsize)) // _LANES * _LANES)
    if lanes >= hw:
        return hw         # single full-extent block along HW
    min_steps = max(1, -(-4 // max(1, n)))
    if hw > _LANES * min_steps:
        lanes = min(lanes, max(_LANES, _round_up(-(-hw // min_steps), _LANES)))
    return lanes          # multiple of 128; ragged last block is masked


@jax.jit
def gated_activation(x):
    """x: (N, 2C, H, W) -> (N, C, H, W) with tanh(x0) * sigmoid(x1)."""
    n, c2, h, w = x.shape
    assert c2 % 2 == 0, "channel dim must be even for chunk(2, dim=1)"
    c = c2 // 2
    hw = h * w
    m = c * hw
    dtype = x.dtype
    itemsize = jnp.dtype(dtype).itemsize

    cost = pl.CostEstimate(
        flops=4 * n * m,
        transcendentals=2 * n * m,
        bytes_accessed=3 * n * m * itemsize,
    )
    cparams = pltpu.CompilerParams(
        dimension_semantics=("parallel", "parallel"),
        vmem_limit_bytes=32 * 1024 * 1024,
    )

    if m % _LANES == 0:
        # Fully dense layout: each half is a contiguous (R, 128) slab.
        r = m // _LANES
        tile_r = _choose_tile_rows(r, itemsize, n)
        grid = (n, pl.cdiv(r, tile_r))
        x_in = x.reshape(n, 2, r, _LANES)
        out = pl.pallas_call(
            _gated_kernel,
            out_shape=jax.ShapeDtypeStruct((n, r, _LANES), dtype),
            grid_spec=pltpu.PrefetchScalarGridSpec(
                num_scalar_prefetch=0,
                grid=grid,
                in_specs=[pl.BlockSpec((None, 2, tile_r, _LANES),
                                       lambda i, j: (i, 0, j, 0))],
                out_specs=pl.BlockSpec((None, tile_r, _LANES),
                                       lambda i, j: (i, j, 0)),
            ),
            compiler_params=cparams,
            cost_estimate=cost,
        )(x_in)
    else:
        # Ragged fallback: keep (C, HW) blocks, tile HW, no pad / no slice.
        tile_hw = _choose_tile_hw(hw, c, itemsize, n)
        grid = (n, pl.cdiv(hw, tile_hw))
        x_in = x.reshape(n, 2, c, hw)
        out = pl.pallas_call(
            _gated_kernel,
            out_shape=jax.ShapeDtypeStruct((n, c, hw), dtype),
            grid_spec=pltpu.PrefetchScalarGridSpec(
                num_scalar_prefetch=0,
                grid=grid,
                in_specs=[pl.BlockSpec((None, 2, c, tile_hw),
                                       lambda i, j: (i, 0, 0, j))],
                out_specs=pl.BlockSpec((None, c, tile_hw),
                                       lambda i, j: (i, 0, j)),
            ),
            compiler_params=cparams,
            cost_estimate=cost,
        )(x_in)

    return out.reshape(n, c, h, w)


def _reference(x):
    a, b = jnp.split(x, 2, axis=1)
    return jnp.tanh(a) * jax.nn.sigmoid(b)


if __name__ == "__main__":
    key = jax.random.PRNGKey(0)
    k0, k1 = jax.random.split(key)

    # Primary path: C*H*W is a multiple of 128 (batch=2, 2C=8 channels, 16x16).
    x = jax.random.normal(k0, (2, 8, 16, 16), dtype=jnp.float32)
    out = jax.block_until_ready(gated_activation(x))
    ref = _reference(x)
    assert out.shape == (2, 4, 16, 16), out.shape
    assert jnp.allclose(out, ref, atol=1e-5, rtol=1e-5), "mismatch (dense path)"

    # Ragged fallback path: C*H*W not a multiple of 128 (5x7 spatial).
    x2 = jax.random.normal(k1, (2, 8, 5, 7), dtype=jnp.float32)
    out2 = jax.block_until_ready(gated_activation(x2))
    ref2 = _reference(x2)
    assert out2.shape == (2, 4, 5, 7), out2.shape
    assert jnp.allclose(out2, ref2, atol=1e-5, rtol=1e-5), "mismatch (ragged path)"

    print("KERNEL_OK")
</pallas_src>

<mosaic_0001>
module attributes {stable_mosaic.version = 11 : i64} {
  func.func @_gated_kernel(%arg0: i32, %arg1: i32, %arg2: memref<1x2x8x128xf32, #tpu.memory_space<vmem>>, %arg3: memref<1x8x128xf32, #tpu.memory_space<vmem>>) attributes {dimension_semantics = [#tpu.dimension_semantics<parallel>, #tpu.dimension_semantics<parallel>], iteration_bounds = array<i64: 2, 1>, scalar_prefetch = 0 : i64, scratch_operands = 0 : i64, tpu.core_type = #tpu.core_type<tc>, window_params = [{transform_indices = @transform_0, window_bounds = array<i64: 1, 2, 8, 128>}, {transform_indices = @transform_1, window_bounds = array<i64: 1, 8, 128>}]} {
    %c0 = arith.constant 0 : index
    %c0_0 = arith.constant 0 : index
    %c0_1 = arith.constant 0 : index
    %c0_2 = arith.constant 0 : index
    %0 = vector.load %arg2[%c0, %c0_0, %c0_1, %c0_2] : memref<1x2x8x128xf32, #tpu.memory_space<vmem>>, vector<1x1x8x128xf32>
    %1 = vector.shape_cast %0 : vector<1x1x8x128xf32> to vector<8x128xf32>
    %c0_3 = arith.constant 0 : index
    %c1 = arith.constant 1 : index
    %c0_4 = arith.constant 0 : index
    %c0_5 = arith.constant 0 : index
    %2 = vector.load %arg2[%c0_3, %c1, %c0_4, %c0_5] : memref<1x2x8x128xf32, #tpu.memory_space<vmem>>, vector<1x1x8x128xf32>
    %3 = vector.shape_cast %2 : vector<1x1x8x128xf32> to vector<8x128xf32>
    %cst = arith.constant 5.000000e-01 : f32
    %4 = vector.broadcast %cst : f32 to vector<8x128xf32>
    %5 = arith.mulf %4, %3 : vector<8x128xf32>
    %6 = math.tanh %5 : vector<8x128xf32>
    %cst_6 = arith.constant 1.000000e+00 : f32
    %7 = vector.broadcast %cst_6 : f32 to vector<8x128xf32>
    %8 = arith.addf %6, %7 : vector<8x128xf32>
    %cst_7 = arith.constant 5.000000e-01 : f32
    %9 = vector.broadcast %cst_7 : f32 to vector<8x128xf32>
    %10 = arith.mulf %9, %8 : vector<8x128xf32>
    %11 = math.tanh %1 : vector<8x128xf32>
    %12 = arith.mulf %11, %10 : vector<8x128xf32>
    %c0_8 = arith.constant 0 : index
    %c0_9 = arith.constant 0 : index
    %c0_10 = arith.constant 0 : index
    %13 = vector.load %arg3[%c0_8, %c0_9, %c0_10] : memref<1x8x128xf32, #tpu.memory_space<vmem>>, vector<1x8x128xf32>
    %14 = vector.shape_cast %13 : vector<1x8x128xf32> to vector<8x128xf32>
    %15 = vector.shape_cast %12 : vector<8x128xf32> to vector<1x8x128xf32>
    tpu.vector_store %arg3[%c0_8, %c0_9, %c0_10], %15 {strides = array<i32>} : memref<1x8x128xf32, #tpu.memory_space<vmem>>, vector<1x8x128xf32>,
    return
  }
  func.func @transform_0(%arg0: i32, %arg1: i32) -> (i32, i32, i32, i32) {
    %c0_i32 = arith.constant 0 : i32
    %c0_i32_0 = arith.constant 0 : i32
    %c0_i32_1 = arith.constant 0 : i32
    return %arg0, %c0_i32, %arg1, %c0_i32_0 : i32, i32, i32, i32
  }
  func.func @transform_1(%arg0: i32, %arg1: i32) -> (i32, i32, i32) {
    %c0_i32 = arith.constant 0 : i32
    %c0_i32_0 = arith.constant 0 : i32
    return %arg0, %arg1, %c0_i32 : i32, i32, i32
  }
}

</mosaic_0001>

<llo_original>
// kernel: gated_activation.1
$region0: #{gated_activation.1}
  #allocation0 [shape = 'u32[]', space=smem, size = 0x4, offset = 0x4, fixed_abs, tag = 'smem constant byte address 0x4 - core index']
  #allocation1 [shape = 'u32[144,128]{1,0:T(1,128)}', space=vmem, size = 0x12000, scoped, tag = 'internal scratch']
  %s0 = inlined_call_operand.vmem [shape: f32[2,2,8,128], index: 0, kind: input, shape index: {}]
  %s1 = inlined_call_operand.vmem [shape: f32[2,8,128], index: 1, kind: output, shape index: {}]
  %s2 = sld [smem:[#allocation0]]
  $region37: #{gated_activation.1} parent=0
    _
  %s4 = ssub.s32 1, %s2
  %s5 = scalar_select 0, %s4, %s2
  loop: start=0, step=1, limit=4
  $region2: #{gated_activation.1} parent=0 // loop_pre_header
    _
  $region3: #{gated_activation.1} parent=0 // loop_header
    %s7 = sphi 0, %s11
    %p8 = scmp.ge.s32.totalorder %s7, 4
    %s14 = sphi 0, %s26
    %s15 = sphi 0, %s22
    %s16 = sphi 0, %s14
    %s17 = sphi 0, %s15
    %s18 = sphi 0, %s16
    %s19 = sphi 0, %s17
    %s31 = sphi 0, %s33
    %s34 = sphi 0, %s31
    %s35 = sphi 0, %s34
    %s51 = sphi 0, %s35
    %s59 = sphi 0, %s61
    %s62 = sphi 0, %s59
    %s63 = sphi 0, %s62
    %s79 = sphi 0, %s63
  $region4: #{gated_activation.1} parent=0 // loop_header_branch
    %10 = sbr.rel (%p8) target = $region8
  $region5: #{gated_activation.1} parent=0 // loop_body
    %s12 = ssub.s32 %s7, 1
    %s13 = ssub.s32 %s7, 2
    %s20 = sadd.s32 1, %s15
    %p21 = scmp.ge.s32.totalorder %s20, 1
    %s22 = scalar_select %p21, 0, %s20
    %s23 = sadd.s32 1, %s14
    %s24 = scalar_select %p21, %s23, %s14
    %p25 = scmp.ge.s32.totalorder %s24, 2
    %s26 = scalar_select %p25, 0, %s24
    %s27 = ssub.s32 %s14, %s26
    %s28 = ssub.s32 %s15, %s22
    %s29 = sor.u32 %s27, %s28
    %p30 = scmp.eq.s32.totalorder %s29, 0
    %s32 = sadd.s32 %s31, 1
    %s33 = scalar_select %p30, %s31, %s32
    %p36 = pneg %p30
    %p37 = scmp.eq.s32.totalorder %s7, 1
    %p38 = por %p36, %p37
    %p39 = scmp.ne.s32.totalorder %s31, %s34
    %p40 = scmp.eq.s32.totalorder %s7, 0
    %p41 = por %p39, %p40
    %p42 = scmp.ne.s32.totalorder %s31, %s34
    %p43 = scmp.eq.s32.totalorder %s12, 1
    %p44 = por %p42, %p43
    %p45 = scmp.ne.s32.totalorder %s34, %s35
    %p46 = scmp.eq.s32.totalorder %s12, 0
    %p47 = por %p45, %p46
    %p48 = scmp.ne.s32.totalorder %s34, %s35
    %p49 = scmp.eq.s32.totalorder %s13, 1
    %p50 = por %p48, %p49
    %p52 = scmp.ne.s32.totalorder %s35, %s51
    %p53 = scmp.eq.s32.totalorder %s13, 0
    %p54 = por %p52, %p53
    %s55 = ssub.s32 %s14, %s26
    %s56 = ssub.s32 %s15, %s22
    %s57 = sor.u32 %s55, %s56
    %p58 = scmp.eq.s32.totalorder %s57, 0
    %s60 = sadd.s32 %s59, 1
    %s61 = scalar_select %p58, %s59, %s60
    %p64 = pneg %p58
    %p65 = scmp.eq.s32.totalorder %s7, 1
    %p66 = por %p64, %p65
    %p67 = scmp.ne.s32.totalorder %s59, %s62
    %p68 = scmp.eq.s32.totalorder %s7, 0
    %p69 = por %p67, %p68
    %p70 = scmp.ne.s32.totalorder %s59, %s62
    %p71 = scmp.eq.s32.totalorder %s12, 1
    %p72 = por %p70, %p71
    %p73 = scmp.ne.s32.totalorder %s62, %s63
    %p74 = scmp.eq.s32.totalorder %s12, 0
    %p75 = por %p73, %p74
    %p76 = scmp.ne.s32.totalorder %s62, %s63
    %p77 = scmp.eq.s32.totalorder %s13, 1
    %p78 = por %p76, %p77
    %p80 = scmp.ne.s32.totalorder %s63, %s79
    %p81 = scmp.eq.s32.totalorder %s13, 0
    %p82 = por %p80, %p81
    %p83 = scmp.le.s32.totalorder 1, %s7
    %p84 = scmp.lt.s32.totalorder %s7, 3
    %p85 = pnand %p83, %p84
    %p86 = pneg %p85
    // Predicated region
    $region9: #{gated_activation.1} parent=5 // pred_check
      _
    $region10: #{gated_activation.1} parent=5 // pred_check_branch
      %88 = sbr.rel (%p85) target = $region12
    $region11: #{gated_activation.1} parent=5 // pred_region
      %s89 = ssub.s32 %s7, 1
    $region12: #{gated_activation.1} parent=5 // pred_fallthru
      _
    %p90 = scmp.lt.s32.totalorder %s7, 2
    // Predicated region
    $region13: #{gated_activation.1} parent=5 // pred_check
      %p91 = pneg %p90
    $region14: #{gated_activation.1} parent=5 // pred_check_branch
      %93 = sbr.rel (%p91) target = $region16
    $region15: #{gated_activation.1} parent=5 // pred_region
      // Predicated region
      $region17: #{gated_activation.1} parent=15 // pred_check
        %p94 = pneg %p41
      $region18: #{gated_activation.1} parent=15 // pred_check_branch
        %96 = sbr.rel (%p94) target = $region20
      $region19: #{gated_activation.1} parent=15 // pred_region
        %p97 = scmp.lt.s32.totalorder %s14, 1
        %s98 = scalar_select %p97, %s14, 1
        %p99 = scmp.lt.s32.totalorder %s15, 0
        %s100 = scalar_select %p99, %s15, 0
        %s101 = smul.addr %s98, 2
        %s102 = sadd.s32 %s100, %s101
        %s103 = smul.addr %s102, 8
        %s104 = scalar_lea.vmem %s0, %s103
      $region20: #{gated_activation.1} parent=15 // pred_fallthru
        _
    $region16: #{gated_activation.1} parent=5 // pred_fallthru
      _
    %p105 = scmp.le.s32.totalorder 1, %s7
    %p106 = scmp.lt.s32.totalorder %s7, 3
    %p107 = pnand %p105, %p106
    %p108 = pneg %p107
    // Predicated region
    $region21: #{gated_activation.1} parent=5 // pred_check
      _
    $region22: #{gated_activation.1} parent=5 // pred_check_branch
      %110 = sbr.rel (%p107) target = $region24
    $region23: #{gated_activation.1} parent=5 // pred_region
      %s111 = ssub.s32 %s7, 1
      %p112 = scmp.lt.s32.totalorder %s16, 1
      %s113 = scalar_select %p112, %s16, 1
      %p114 = scmp.lt.s32.totalorder %s17, 0
      %s115 = scalar_select %p114, %s17, 0
      %s116 = smul.addr %s113, 2
      %s117 = sadd.s32 %s115, %s116
      %s118 = smul.addr %s117, 8
      %s119 = scalar_lea.vmem %s0, %s118
      %p120 = pneg %p47
      %p121 = pneg %p44
      %p122 = pneg %p75
      %p123 = pneg %p72
      %p124 = scmp.lt.s32.totalorder %s16, 1
      %s125 = scalar_select %p124, %s16, 1
      %p126 = scmp.lt.s32.totalorder %s17, 0
      %s127 = scalar_select %p126, %s17, 0
      %s128 = sadd.s32 %s127, %s125
      %s129 = smul.addr %s128, 8
      %s130 = scalar_lea.vmem %s1, %s129
      %p131 = scmp.lt.s32.totalorder %s16, 1
      %s132 = scalar_select %p131, %s16, 1
      %p133 = scmp.lt.s32.totalorder %s17, 0
      %s134 = scalar_select %p133, %s17, 0
      %s135 = smul.addr %s132, 2
      %s136 = sadd.s32 %s134, %s135
      %s137 = smul.addr %s136, 8
      %s138 = scalar_lea.vmem %s0, %s137
      %p139 = scmp.lt.s32.totalorder %s16, 1
      %s140 = scalar_select %p139, %s16, 1
      %p141 = scmp.lt.s32.totalorder %s17, 0
      %s142 = scalar_select %p141, %s17, 0
      %s143 = sadd.s32 %s142, %s140
      %s144 = smul.addr %s143, 8
      %s145 = scalar_lea.vmem %s1, %s144
      %v146 = vld [vmem:[%s138] sm:$0xff]
      %s147 = scalar_lea.vmem %s138, 8
      %v148 = vld [vmem:[%s147] sm:$0xff]
      %v149 = vmul.f32 %v148, 0.5
      %v150 = vtanh.pop %v149
      %v151 = vadd.f32 %v150, 1.0
      %v152 = vmul.f32 %v151, 0.5
      %v153 = vtanh.pop %v146
      %v154 = vmul.f32 %v153, %v152
      %155 = vst [vmem:[%s145] sm:$0xff] %v154
      %p156 = scmp.lt.s32.totalorder %s16, 1
      %s157 = scalar_select %p156, %s16, 1
      %p158 = scmp.lt.s32.totalorder %s17, 0
      %s159 = scalar_select %p158, %s17, 0
      %s160 = sadd.s32 %s159, %s157
      %s161 = smul.addr %s160, 8
      %s162 = scalar_lea.vmem %s1, %s161
      // Predicated region
      $region25: #{gated_activation.1} parent=23 // pred_check
        %p163 = pneg %p72
      $region26: #{gated_activation.1} parent=23 // pred_check_branch
        %165 = sbr.rel (%p163) target = $region28
      $region27: #{gated_activation.1} parent=23 // pred_region
        _
      $region28: #{gated_activation.1} parent=23 // pred_fallthru
        _
    $region24: #{gated_activation.1} parent=5 // pred_fallthru
      _
    %p166 = scmp.le.s32.totalorder 2, %s7
    // Predicated region
    $region29: #{gated_activation.1} parent=5 // pred_check
      %p167 = pneg %p166
    $region30: #{gated_activation.1} parent=5 // pred_check_branch
      %169 = sbr.rel (%p167) target = $region32
    $region31: #{gated_activation.1} parent=5 // pred_region
      %s170 = ssub.s32 %s7, 2
      // Predicated region
      $region33: #{gated_activation.1} parent=31 // pred_check
        %p171 = pneg %p78
      $region34: #{gated_activation.1} parent=31 // pred_check_branch
        %173 = sbr.rel (%p171) target = $region36
      $region35: #{gated_activation.1} parent=31 // pred_region
        %p174 = scmp.lt.s32.totalorder %s18, 1
        %s175 = scalar_select %p174, %s18, 1
        %p176 = scmp.lt.s32.totalorder %s19, 0
        %s177 = scalar_select %p176, %s19, 0
        %s178 = sadd.s32 %s177, %s175
        %s179 = smul.addr %s178, 8
        %s180 = scalar_lea.vmem %s1, %s179
      $region36: #{gated_activation.1} parent=31 // pred_fallthru
        _
    $region32: #{gated_activation.1} parent=5 // pred_fallthru
      _
  $region6: #{gated_activation.1} parent=0 // loop_footer
    %s11 = sadd.s32 1, %s7
  $region7: #{gated_activation.1} parent=0 // loop_footer_branch
    %6 = sbr.rel target = $region3
  $region8: #{gated_activation.1} parent=0 // loop_exit
    _

</llo_original>
